<compile_context>
chip_gen: v5e
topology: v5e:2x2
jax: 0.10.0
libtpu: 0.0.40
codegen_flags: <defaults>
</compile_context>

<pallas_src>
import jax
import jax.numpy as jnp
from jax import lax
from jax.experimental import pallas as pl
from jax.experimental.pallas import tpu as pltpu

# ---- model hyper-parameters (from the module's __init__ / config) ----------
INPUT_SIZE = 9
HIDDEN_SIZE = 32
HEAD_HIDDEN_SIZE = 32
OUTPUT_SIZE = 1           # len(prediction_targets)
PREDICTION_STEPS = 4
NUM_LAYERS = 1            # dropout inactive (num_layers == 1)
BATCH = 2
SEQ_LEN = 8

H = HIDDEN_SIZE
HH = HEAD_HIDDEN_SIZE
OS = OUTPUT_SIZE * PREDICTION_STEPS

LANE = 128
F_PAD = 16                 # padded feature width: 9 real + 1 constant-1 + 6 zero
BIAS_FEATURE = INPUT_SIZE  # constant-1 column that carries (b_ih + b_hh)
BATCH_TILE = 8             # sublane-dense batch tile
OUT_PAD = LANE             # lane-dense padded output width (true width = 4)

# ---- packed weight slab layout: one lane-dense [224, 128] f32 input --------
ROW_WIH = 0                  # rows   0:16  W_ih^T (perm), row 9 = b_ih+b_hh
ROW_WHH = ROW_WIH + F_PAD    # rows  16:48  W_hh^T (perm)
ROW_W1 = ROW_WHH + H         # rows  48:80  head W1^T (lanes 0:32)
ROW_B1 = ROW_W1 + H          # rows  80:88  head b1   (row 80, lanes 0:32)
ROW_W2 = ROW_B1 + 8          # rows  88:216 head W2^T zero-padded to 128x128
ROW_B2 = ROW_W2 + LANE       # rows 216:224 head b2   (row 216, lanes 0:4)
SLAB_ROWS = ROW_B2 + 8       # 224


# ---------------------------- Pallas kernel ---------------------------------
def lstm_head_kernel(x_ref, w_ref, out_ref):
    """In-kernel input projection + LSTM recurrence + FC head.

    x_ref : [T, TB, F_PAD] time-major input; feature col 9 == 1.0 (bias),
            cols 10:16 == 0, padded batch rows == 0.
    w_ref : [224, 128] packed weight slab (see ROW_* layout above); all gate
            columns permuted to (i, f, o, g).
    out   : [TB, 128] lane-dense; cols 0:4 hold the 4 prediction steps.
    """
    T, TB, FP = x_ref.shape

    # Static, sublane-aligned views of the single weight slab (no extra DMAs).
    w_ih = w_ref[ROW_WIH:ROW_WIH + FP, :]          # (16, 128)
    w_hh = w_ref[ROW_WHH:ROW_WHH + H, :]           # (32, 128)
    w1 = w_ref[ROW_W1:ROW_W1 + H, :]               # (32, 128)
    b1 = w_ref[ROW_B1:ROW_B1 + 1, :]               # (1, 128)
    w2 = w_ref[ROW_W2:ROW_W2 + LANE, :]            # (128, 128)
    b2 = w_ref[ROW_B2:ROW_B2 + 1, :]               # (1, 128)

    # Input projection (x @ W_ih^T + bias), hoisted off the serial recurrence.
    # Bias rides in via the constant-1 feature column -> tiny MXU matmuls.
    xp = [jnp.dot(x_ref[t], w_ih, preferred_element_type=jnp.float32)
          for t in range(T)]                       # T x (TB, 4H)

    # LSTM recurrence, fully unrolled (T static and small).  Only the
    # h-dependent matmul is on the serial critical path.
    h = jnp.zeros((TB, H), jnp.float32)
    c = jnp.zeros((TB, H), jnp.float32)
    for t in range(T):
        gates = jnp.dot(h, w_hh, preferred_element_type=jnp.float32) + xp[t]
        # Gate columns are (i, f, o, g): one sigmoid over 3H contiguous lanes,
        # one tanh over the last H lanes.
        sig = jax.nn.sigmoid(gates[:, 0:3 * H])
        g = jnp.tanh(gates[:, 3 * H:4 * H])
        i = sig[:, 0:H]
        f = sig[:, H:2 * H]
        o = sig[:, 2 * H:3 * H]
        c = f * c + i * g
        h = o * jnp.tanh(c)

    # FC head: Linear -> ReLU -> Dropout(identity at inference) -> Linear.
    # All padded lanes/rows are zero, so the padded matmuls are exact.
    hidden = jnp.maximum(
        jnp.dot(h, w1, preferred_element_type=jnp.float32) + b1, 0.0)
    out_ref[...] = jnp.dot(hidden, w2, preferred_element_type=jnp.float32) + b2


# ------------------------------- wrapper -------------------------------------
def _permute_gate_cols(a):
    """Reorder last-axis gate blocks from PyTorch (i, f, g, o) to (i, f, o, g)."""
    return jnp.concatenate(
        [a[..., :2 * H], a[..., 3 * H:4 * H], a[..., 2 * H:3 * H]], axis=-1)


def _pack_weight_slab(params):
    """Pack every weight/bias into one lane-dense [224, 128] f32 slab."""
    w_ih, w_hh, b_ih, b_hh, w1, b1, w2, b2 = params
    slab = jnp.zeros((SLAB_ROWS, LANE), jnp.float32)
    slab = slab.at[ROW_WIH:ROW_WIH + INPUT_SIZE, :].set(
        _permute_gate_cols(w_ih.T))
    slab = slab.at[ROW_WIH + BIAS_FEATURE, :].set(
        _permute_gate_cols(b_ih + b_hh))
    slab = slab.at[ROW_WHH:ROW_WHH + H, :].set(_permute_gate_cols(w_hh.T))
    slab = slab.at[ROW_W1:ROW_W1 + H, 0:HH].set(w1.T)
    slab = slab.at[ROW_B1, 0:HH].set(b1)
    slab = slab.at[ROW_W2:ROW_W2 + HH, 0:OS].set(w2.T)
    slab = slab.at[ROW_B2, 0:OS].set(b2)
    return slab


@jax.jit
def lstm_forward(x, params):
    """x: [B, T, F] float32 (batch_first, same as the PyTorch module)."""
    B, T, F = x.shape
    assert F == INPUT_SIZE

    w_slab = _pack_weight_slab(params)

    # Pad batch to a sublane-dense multiple of 8; pad features to 16 with a
    # constant-1 column carrying the LSTM bias; go time-major.
    B_pad = max(BATCH_TILE, ((B + BATCH_TILE - 1) // BATCH_TILE) * BATCH_TILE)
    x_p = jnp.zeros((B_pad, T, F_PAD), jnp.float32)
    x_p = x_p.at[:B, :, :F].set(x)
    x_p = x_p.at[:, :, BIAS_FEATURE].set(1.0)
    x_tm = jnp.transpose(x_p, (1, 0, 2))            # (T, B_pad, F_PAD)

    num_tiles = B_pad // BATCH_TILE

    # Advisory cost estimate (actually-executed padded shapes).
    flops = (2 * T * B_pad * F_PAD * 4 * H           # input projection
             + 2 * T * B_pad * H * 4 * H             # recurrence
             + 2 * B_pad * H * LANE                  # head layer 1
             + 2 * B_pad * LANE * LANE)              # head layer 2
    transcendentals = T * B_pad * 5 * H              # sigmoid(3H) + 2*tanh(H)
    bytes_accessed = 4 * (x_tm.size + SLAB_ROWS * LANE + B_pad * OUT_PAD)
    cost = pl.CostEstimate(flops=flops, transcendentals=transcendentals,
                           bytes_accessed=bytes_accessed)
    out_shape = jax.ShapeDtypeStruct((B_pad, OUT_PAD), jnp.float32)

    if num_tiles == 1:
        # Small-batch path: one program -> no grid machinery, whole operands
        # resident in VMEM, two input DMAs total (x + weight slab).
        out = pl.pallas_call(
            lstm_head_kernel,
            out_shape=out_shape,
            in_specs=[pl.BlockSpec(memory_space=pltpu.MemorySpace.VMEM),
                      pl.BlockSpec(memory_space=pltpu.MemorySpace.VMEM)],
            out_specs=pl.BlockSpec(memory_space=pltpu.MemorySpace.VMEM),
            cost_estimate=cost,
        )(x_tm, w_slab)
    else:
        # Larger batches: batch-tiled "parallel" grid (v7x can split the
        # programs across its 2 TensorCores); the constant weight slab is
        # single-buffered since it never changes across programs.
        out = pl.pallas_call(
            lstm_head_kernel,
            out_shape=out_shape,
            grid_spec=pltpu.PrefetchScalarGridSpec(
                num_scalar_prefetch=0,
                grid=(num_tiles,),
                in_specs=[
                    pl.BlockSpec((T, BATCH_TILE, F_PAD), lambda b: (0, b, 0)),
                    pl.BlockSpec((SLAB_ROWS, LANE), lambda b: (0, 0),
                                 pipeline_mode=pl.Buffered(1)),
                ],
                out_specs=pl.BlockSpec((BATCH_TILE, OUT_PAD),
                                       lambda b: (b, 0)),
            ),
            compiler_params=pltpu.CompilerParams(
                dimension_semantics=("parallel",)),
            cost_estimate=cost,
        )(x_tm, w_slab)

    # output.view(batch_size, prediction_steps)
    return out[:B, :OS].reshape(B, PREDICTION_STEPS)


# --------------------------- pure-JAX reference ------------------------------
def lstm_forward_ref(x, params):
    """Reference with the original PyTorch (i, f, g, o) gate ordering."""
    w_ih, w_hh, b_ih, b_hh, w1, b1, w2, b2 = params
    B, T, F = x.shape

    def cell(carry, x_t):
        h, c = carry
        gates = x_t @ w_ih.T + h @ w_hh.T + b_ih + b_hh
        i = jax.nn.sigmoid(gates[:, 0:H])
        f = jax.nn.sigmoid(gates[:, H:2 * H])
        g = jnp.tanh(gates[:, 2 * H:3 * H])
        o = jax.nn.sigmoid(gates[:, 3 * H:4 * H])
        c = f * c + i * g
        h = o * jnp.tanh(c)
        return (h, c), None

    (h, _), _ = lax.scan(cell,
                         (jnp.zeros((B, H), jnp.float32),
                          jnp.zeros((B, H), jnp.float32)),
                         jnp.transpose(x, (1, 0, 2)))
    hidden = jnp.maximum(h @ w1.T + b1, 0.0)
    out = hidden @ w2.T + b2
    return out.reshape(B, PREDICTION_STEPS)


# --------------------------- deterministic params ----------------------------
def init_params(key):
    ks = jax.random.split(key, 9)
    k_lstm = 1.0 / jnp.sqrt(jnp.float32(HIDDEN_SIZE))
    w_ih = jax.random.uniform(ks[0], (4 * HIDDEN_SIZE, INPUT_SIZE),
                              jnp.float32, -k_lstm, k_lstm)
    w_hh = jax.random.uniform(ks[1], (4 * HIDDEN_SIZE, HIDDEN_SIZE),
                              jnp.float32, -k_lstm, k_lstm)
    b_ih = jax.random.uniform(ks[2], (4 * HIDDEN_SIZE,),
                              jnp.float32, -k_lstm, k_lstm)
    b_hh = jax.random.uniform(ks[3], (4 * HIDDEN_SIZE,),
                              jnp.float32, -k_lstm, k_lstm)

    k1 = 1.0 / jnp.sqrt(jnp.float32(HIDDEN_SIZE))
    w1 = jax.random.uniform(ks[4], (HEAD_HIDDEN_SIZE, HIDDEN_SIZE),
                            jnp.float32, -k1, k1)
    b1 = jax.random.uniform(ks[5], (HEAD_HIDDEN_SIZE,),
                            jnp.float32, -k1, k1)

    k2 = 1.0 / jnp.sqrt(jnp.float32(HEAD_HIDDEN_SIZE))
    w2 = jax.random.uniform(ks[6], (OUTPUT_SIZE * PREDICTION_STEPS,
                                    HEAD_HIDDEN_SIZE),
                            jnp.float32, -k2, k2)
    b2 = jax.random.uniform(ks[7], (OUTPUT_SIZE * PREDICTION_STEPS,),
                            jnp.float32, -k2, k2)
    return (w_ih, w_hh, b_ih, b_hh, w1, b1, w2, b2)


if __name__ == "__main__":
    key = jax.random.PRNGKey(0)
    k_param, k_x = jax.random.split(key)
    params = init_params(k_param)
    x = jax.random.normal(k_x, (BATCH, SEQ_LEN, INPUT_SIZE), jnp.float32)

    out = lstm_forward(x, params)
    out = jax.block_until_ready(out)

    assert out.shape == (BATCH, PREDICTION_STEPS), out.shape
    assert out.dtype == jnp.float32
    assert bool(jnp.all(jnp.isfinite(out)))

    # Numerical check against a pure-JAX reference (original gate ordering)
    # to guard the gate permutation, bias-as-feature fold, and slab packing.
    ref = jax.block_until_ready(lstm_forward_ref(x, params))
    assert bool(jnp.allclose(out, ref, atol=1e-3, rtol=1e-3)), (out, ref)

    print("KERNEL_OK")
</pallas_src>

<mosaic_0001>
module attributes {stable_mosaic.version = 11 : i64} {
  func.func @lstm_head_kernel(%arg0: memref<8x8x16xf32, #tpu.memory_space<vmem>>, %arg1: memref<224x128xf32, #tpu.memory_space<vmem>>, %arg2: memref<8x128xf32, #tpu.memory_space<vmem>>) attributes {dimension_semantics = [], scalar_prefetch = 0 : i64, scratch_operands = 0 : i64, tpu.core_type = #tpu.core_type<tc>} {
    %c0 = arith.constant 0 : index
    %c0_0 = arith.constant 0 : index
    %0 = vector.load %arg1[%c0, %c0_0] : memref<224x128xf32, #tpu.memory_space<vmem>>, vector<16x128xf32>
    %c16 = arith.constant 16 : index
    %c0_1 = arith.constant 0 : index
    %1 = vector.load %arg1[%c16, %c0_1] : memref<224x128xf32, #tpu.memory_space<vmem>>, vector<32x128xf32>
    %c48 = arith.constant 48 : index
    %c0_2 = arith.constant 0 : index
    %2 = vector.load %arg1[%c48, %c0_2] : memref<224x128xf32, #tpu.memory_space<vmem>>, vector<32x128xf32>
    %c80 = arith.constant 80 : index
    %c0_3 = arith.constant 0 : index
    %3 = vector.load %arg1[%c80, %c0_3] : memref<224x128xf32, #tpu.memory_space<vmem>>, vector<1x128xf32>
    %c88 = arith.constant 88 : index
    %c0_4 = arith.constant 0 : index
    %4 = vector.load %arg1[%c88, %c0_4] : memref<224x128xf32, #tpu.memory_space<vmem>>, vector<128x128xf32>
    %c216 = arith.constant 216 : index
    %c0_5 = arith.constant 0 : index
    %5 = vector.load %arg1[%c216, %c0_5] : memref<224x128xf32, #tpu.memory_space<vmem>>, vector<1x128xf32>
    %c0_6 = arith.constant 0 : index
    %c0_7 = arith.constant 0 : index
    %c0_8 = arith.constant 0 : index
    %6 = vector.load %arg0[%c0_6, %c0_7, %c0_8] : memref<8x8x16xf32, #tpu.memory_space<vmem>>, vector<1x8x16xf32>
    %7 = vector.shape_cast %6 : vector<1x8x16xf32> to vector<8x16xf32>
    %cst = arith.constant dense<0.000000e+00> : vector<8x128xf32>
    %8 = tpu.matmul %7, %0, %cst {dimension_numbers = #tpu.dot_dimension_numbers<[1], [0], [0], [1], [0, 0, 1, 1], [], []>} : vector<8x16xf32>, vector<16x128xf32>, vector<8x128xf32> -> vector<8x128xf32>
    %c1 = arith.constant 1 : index
    %c0_9 = arith.constant 0 : index
    %c0_10 = arith.constant 0 : index
    %9 = vector.load %arg0[%c1, %c0_9, %c0_10] : memref<8x8x16xf32, #tpu.memory_space<vmem>>, vector<1x8x16xf32>
    %10 = vector.shape_cast %9 : vector<1x8x16xf32> to vector<8x16xf32>
    %cst_11 = arith.constant dense<0.000000e+00> : vector<8x128xf32>
    %11 = tpu.matmul %10, %0, %cst_11 {dimension_numbers = #tpu.dot_dimension_numbers<[1], [0], [0], [1], [0, 0, 1, 1], [], []>} : vector<8x16xf32>, vector<16x128xf32>, vector<8x128xf32> -> vector<8x128xf32>
    %c2 = arith.constant 2 : index
    %c0_12 = arith.constant 0 : index
    %c0_13 = arith.constant 0 : index
    %12 = vector.load %arg0[%c2, %c0_12, %c0_13] : memref<8x8x16xf32, #tpu.memory_space<vmem>>, vector<1x8x16xf32>
    %13 = vector.shape_cast %12 : vector<1x8x16xf32> to vector<8x16xf32>
    %cst_14 = arith.constant dense<0.000000e+00> : vector<8x128xf32>
    %14 = tpu.matmul %13, %0, %cst_14 {dimension_numbers = #tpu.dot_dimension_numbers<[1], [0], [0], [1], [0, 0, 1, 1], [], []>} : vector<8x16xf32>, vector<16x128xf32>, vector<8x128xf32> -> vector<8x128xf32>
    %c3 = arith.constant 3 : index
    %c0_15 = arith.constant 0 : index
    %c0_16 = arith.constant 0 : index
    %15 = vector.load %arg0[%c3, %c0_15, %c0_16] : memref<8x8x16xf32, #tpu.memory_space<vmem>>, vector<1x8x16xf32>
    %16 = vector.shape_cast %15 : vector<1x8x16xf32> to vector<8x16xf32>
    %cst_17 = arith.constant dense<0.000000e+00> : vector<8x128xf32>
    %17 = tpu.matmul %16, %0, %cst_17 {dimension_numbers = #tpu.dot_dimension_numbers<[1], [0], [0], [1], [0, 0, 1, 1], [], []>} : vector<8x16xf32>, vector<16x128xf32>, vector<8x128xf32> -> vector<8x128xf32>
    %c4 = arith.constant 4 : index
    %c0_18 = arith.constant 0 : index
    %c0_19 = arith.constant 0 : index
    %18 = vector.load %arg0[%c4, %c0_18, %c0_19] : memref<8x8x16xf32, #tpu.memory_space<vmem>>, vector<1x8x16xf32>
    %19 = vector.shape_cast %18 : vector<1x8x16xf32> to vector<8x16xf32>
    %cst_20 = arith.constant dense<0.000000e+00> : vector<8x128xf32>
    %20 = tpu.matmul %19, %0, %cst_20 {dimension_numbers = #tpu.dot_dimension_numbers<[1], [0], [0], [1], [0, 0, 1, 1], [], []>} : vector<8x16xf32>, vector<16x128xf32>, vector<8x128xf32> -> vector<8x128xf32>
    %c5 = arith.constant 5 : index
    %c0_21 = arith.constant 0 : index
    %c0_22 = arith.constant 0 : index
    %21 = vector.load %arg0[%c5, %c0_21, %c0_22] : memref<8x8x16xf32, #tpu.memory_space<vmem>>, vector<1x8x16xf32>
    %22 = vector.shape_cast %21 : vector<1x8x16xf32> to vector<8x16xf32>
    %cst_23 = arith.constant dense<0.000000e+00> : vector<8x128xf32>
    %23 = tpu.matmul %22, %0, %cst_23 {dimension_numbers = #tpu.dot_dimension_numbers<[1], [0], [0], [1], [0, 0, 1, 1], [], []>} : vector<8x16xf32>, vector<16x128xf32>, vector<8x128xf32> -> vector<8x128xf32>
    %c6 = arith.constant 6 : index
    %c0_24 = arith.constant 0 : index
    %c0_25 = arith.constant 0 : index
    %24 = vector.load %arg0[%c6, %c0_24, %c0_25] : memref<8x8x16xf32, #tpu.memory_space<vmem>>, vector<1x8x16xf32>
    %25 = vector.shape_cast %24 : vector<1x8x16xf32> to vector<8x16xf32>
    %cst_26 = arith.constant dense<0.000000e+00> : vector<8x128xf32>
    %26 = tpu.matmul %25, %0, %cst_26 {dimension_numbers = #tpu.dot_dimension_numbers<[1], [0], [0], [1], [0, 0, 1, 1], [], []>} : vector<8x16xf32>, vector<16x128xf32>, vector<8x128xf32> -> vector<8x128xf32>
    %c7 = arith.constant 7 : index
    %c0_27 = arith.constant 0 : index
    %c0_28 = arith.constant 0 : index
    %27 = vector.load %arg0[%c7, %c0_27, %c0_28] : memref<8x8x16xf32, #tpu.memory_space<vmem>>, vector<1x8x16xf32>
    %28 = vector.shape_cast %27 : vector<1x8x16xf32> to vector<8x16xf32>
    %cst_29 = arith.constant dense<0.000000e+00> : vector<8x128xf32>
    %29 = tpu.matmul %28, %0, %cst_29 {dimension_numbers = #tpu.dot_dimension_numbers<[1], [0], [0], [1], [0, 0, 1, 1], [], []>} : vector<8x16xf32>, vector<16x128xf32>, vector<8x128xf32> -> vector<8x128xf32>
    %cst_30 = arith.constant 0.000000e+00 : f32
    %30 = vector.broadcast %cst_30 : f32 to vector<8x32xf32>
    %cst_31 = arith.constant 0.000000e+00 : f32
    %31 = vector.broadcast %cst_31 : f32 to vector<8x32xf32>
    %cst_32 = arith.constant dense<0.000000e+00> : vector<8x128xf32>
    %32 = tpu.matmul %30, %1, %cst_32 {dimension_numbers = #tpu.dot_dimension_numbers<[1], [0], [0], [1], [0, 0, 1, 1], [], []>} : vector<8x32xf32>, vector<32x128xf32>, vector<8x128xf32> -> vector<8x128xf32>
    %33 = arith.addf %32, %8 : vector<8x128xf32>
    %34 = vector.extract_strided_slice %33 {offsets = [0, 0], sizes = [8, 96], strides = [1, 1]} : vector<8x128xf32> to vector<8x96xf32>
    %35 = arith.negf %34 : vector<8x96xf32>
    %36 = math.exp %35 : vector<8x96xf32>
    %cst_33 = arith.constant 1.000000e+00 : f32
    %37 = vector.broadcast %cst_33 : f32 to vector<8x96xf32>
    %38 = arith.addf %37, %36 : vector<8x96xf32>
    %39 = arith.divf %37, %38 : vector<8x96xf32>
    %40 = vector.extract_strided_slice %33 {offsets = [0, 96], sizes = [8, 32], strides = [1, 1]} : vector<8x128xf32> to vector<8x32xf32>
    %41 = math.tanh %40 : vector<8x32xf32>
    %42 = vector.extract_strided_slice %39 {offsets = [0, 0], sizes = [8, 32], strides = [1, 1]} : vector<8x96xf32> to vector<8x32xf32>
    %43 = vector.extract_strided_slice %39 {offsets = [0, 32], sizes = [8, 32], strides = [1, 1]} : vector<8x96xf32> to vector<8x32xf32>
    %44 = vector.extract_strided_slice %39 {offsets = [0, 64], sizes = [8, 32], strides = [1, 1]} : vector<8x96xf32> to vector<8x32xf32>
    %45 = arith.mulf %43, %31 : vector<8x32xf32>
    %46 = arith.mulf %42, %41 : vector<8x32xf32>
    %47 = arith.addf %45, %46 : vector<8x32xf32>
    %48 = math.tanh %47 : vector<8x32xf32>
    %49 = arith.mulf %44, %48 : vector<8x32xf32>
    %cst_34 = arith.constant dense<0.000000e+00> : vector<8x128xf32>
    %50 = tpu.matmul %49, %1, %cst_34 {dimension_numbers = #tpu.dot_dimension_numbers<[1], [0], [0], [1], [0, 0, 1, 1], [], []>} : vector<8x32xf32>, vector<32x128xf32>, vector<8x128xf32> -> vector<8x128xf32>
    %51 = arith.addf %50, %11 : vector<8x128xf32>
    %52 = vector.extract_strided_slice %51 {offsets = [0, 0], sizes = [8, 96], strides = [1, 1]} : vector<8x128xf32> to vector<8x96xf32>
    %53 = arith.negf %52 : vector<8x96xf32>
    %54 = math.exp %53 : vector<8x96xf32>
    %cst_35 = arith.constant 1.000000e+00 : f32
    %55 = vector.broadcast %cst_35 : f32 to vector<8x96xf32>
    %56 = arith.addf %55, %54 : vector<8x96xf32>
    %57 = arith.divf %55, %56 : vector<8x96xf32>
    %58 = vector.extract_strided_slice %51 {offsets = [0, 96], sizes = [8, 32], strides = [1, 1]} : vector<8x128xf32> to vector<8x32xf32>
    %59 = math.tanh %58 : vector<8x32xf32>
    %60 = vector.extract_strided_slice %57 {offsets = [0, 0], sizes = [8, 32], strides = [1, 1]} : vector<8x96xf32> to vector<8x32xf32>
    %61 = vector.extract_strided_slice %57 {offsets = [0, 32], sizes = [8, 32], strides = [1, 1]} : vector<8x96xf32> to vector<8x32xf32>
    %62 = vector.extract_strided_slice %57 {offsets = [0, 64], sizes = [8, 32], strides = [1, 1]} : vector<8x96xf32> to vector<8x32xf32>
    %63 = arith.mulf %61, %47 : vector<8x32xf32>
    %64 = arith.mulf %60, %59 : vector<8x32xf32>
    %65 = arith.addf %63, %64 : vector<8x32xf32>
    %66 = math.tanh %65 : vector<8x32xf32>
    %67 = arith.mulf %62, %66 : vector<8x32xf32>
    %cst_36 = arith.constant dense<0.000000e+00> : vector<8x128xf32>
    %68 = tpu.matmul %67, %1, %cst_36 {dimension_numbers = #tpu.dot_dimension_numbers<[1], [0], [0], [1], [0, 0, 1, 1], [], []>} : vector<8x32xf32>, vector<32x128xf32>, vector<8x128xf32> -> vector<8x128xf32>
    %69 = arith.addf %68, %14 : vector<8x128xf32>
    %70 = vector.extract_strided_slice %69 {offsets = [0, 0], sizes = [8, 96], strides = [1, 1]} : vector<8x128xf32> to vector<8x96xf32>
    %71 = arith.negf %70 : vector<8x96xf32>
    %72 = math.exp %71 : vector<8x96xf32>
    %cst_37 = arith.constant 1.000000e+00 : f32
    %73 = vector.broadcast %cst_37 : f32 to vector<8x96xf32>
    %74 = arith.addf %73, %72 : vector<8x96xf32>
    %75 = arith.divf %73, %74 : vector<8x96xf32>
    %76 = vector.extract_strided_slice %69 {offsets = [0, 96], sizes = [8, 32], strides = [1, 1]} : vector<8x128xf32> to vector<8x32xf32>
    %77 = math.tanh %76 : vector<8x32xf32>
    %78 = vector.extract_strided_slice %75 {offsets = [0, 0], sizes = [8, 32], strides = [1, 1]} : vector<8x96xf32> to vector<8x32xf32>
    %79 = vector.extract_strided_slice %75 {offsets = [0, 32], sizes = [8, 32], strides = [1, 1]} : vector<8x96xf32> to vector<8x32xf32>
    %80 = vector.extract_strided_slice %75 {offsets = [0, 64], sizes = [8, 32], strides = [1, 1]} : vector<8x96xf32> to vector<8x32xf32>
    %81 = arith.mulf %79, %65 : vector<8x32xf32>
    %82 = arith.mulf %78, %77 : vector<8x32xf32>
    %83 = arith.addf %81, %82 : vector<8x32xf32>
    %84 = math.tanh %83 : vector<8x32xf32>
    %85 = arith.mulf %80, %84 : vector<8x32xf32>
    %cst_38 = arith.constant dense<0.000000e+00> : vector<8x128xf32>
    %86 = tpu.matmul %85, %1, %cst_38 {dimension_numbers = #tpu.dot_dimension_numbers<[1], [0], [0], [1], [0, 0, 1, 1], [], []>} : vector<8x32xf32>, vector<32x128xf32>, vector<8x128xf32> -> vector<8x128xf32>
    %87 = arith.addf %86, %17 : vector<8x128xf32>
    %88 = vector.extract_strided_slice %87 {offsets = [0, 0], sizes = [8, 96], strides = [1, 1]} : vector<8x128xf32> to vector<8x96xf32>
    %89 = arith.negf %88 : vector<8x96xf32>
    %90 = math.exp %89 : vector<8x96xf32>
    %cst_39 = arith.constant 1.000000e+00 : f32
    %91 = vector.broadcast %cst_39 : f32 to vector<8x96xf32>
    %92 = arith.addf %91, %90 : vector<8x96xf32>
    %93 = arith.divf %91, %92 : vector<8x96xf32>
    %94 = vector.extract_strided_slice %87 {offsets = [0, 96], sizes = [8, 32], strides = [1, 1]} : vector<8x128xf32> to vector<8x32xf32>
    %95 = math.tanh %94 : vector<8x32xf32>
    %96 = vector.extract_strided_slice %93 {offsets = [0, 0], sizes = [8, 32], strides = [1, 1]} : vector<8x96xf32> to vector<8x32xf32>
    %97 = vector.extract_strided_slice %93 {offsets = [0, 32], sizes = [8, 32], strides = [1, 1]} : vector<8x96xf32> to vector<8x32xf32>
    %98 = vector.extract_strided_slice %93 {offsets = [0, 64], sizes = [8, 32], strides = [1, 1]} : vector<8x96xf32> to vector<8x32xf32>
    %99 = arith.mulf %97, %83 : vector<8x32xf32>
    %100 = arith.mulf %96, %95 : vector<8x32xf32>
    %101 = arith.addf %99, %100 : vector<8x32xf32>
    %102 = math.tanh %101 : vector<8x32xf32>
    %103 = arith.mulf %98, %102 : vector<8x32xf32>
    %cst_40 = arith.constant dense<0.000000e+00> : vector<8x128xf32>
    %104 = tpu.matmul %103, %1, %cst_40 {dimension_numbers = #tpu.dot_dimension_numbers<[1], [0], [0], [1], [0, 0, 1, 1], [], []>} : vector<8x32xf32>, vector<32x128xf32>, vector<8x128xf32> -> vector<8x128xf32>
    %105 = arith.addf %104, %20 : vector<8x128xf32>
    %106 = vector.extract_strided_slice %105 {offsets = [0, 0], sizes = [8, 96], strides = [1, 1]} : vector<8x128xf32> to vector<8x96xf32>
    %107 = arith.negf %106 : vector<8x96xf32>
    %108 = math.exp %107 : vector<8x96xf32>
    %cst_41 = arith.constant 1.000000e+00 : f32
    %109 = vector.broadcast %cst_41 : f32 to vector<8x96xf32>
    %110 = arith.addf %109, %108 : vector<8x96xf32>
    %111 = arith.divf %109, %110 : vector<8x96xf32>
    %112 = vector.extract_strided_slice %105 {offsets = [0, 96], sizes = [8, 32], strides = [1, 1]} : vector<8x128xf32> to vector<8x32xf32>
    %113 = math.tanh %112 : vector<8x32xf32>
    %114 = vector.extract_strided_slice %111 {offsets = [0, 0], sizes = [8, 32], strides = [1, 1]} : vector<8x96xf32> to vector<8x32xf32>
    %115 = vector.extract_strided_slice %111 {offsets = [0, 32], sizes = [8, 32], strides = [1, 1]} : vector<8x96xf32> to vector<8x32xf32>
    %116 = vector.extract_strided_slice %111 {offsets = [0, 64], sizes = [8, 32], strides = [1, 1]} : vector<8x96xf32> to vector<8x32xf32>
    %117 = arith.mulf %115, %101 : vector<8x32xf32>
    %118 = arith.mulf %114, %113 : vector<8x32xf32>
    %119 = arith.addf %117, %118 : vector<8x32xf32>
    %120 = math.tanh %119 : vector<8x32xf32>
    %121 = arith.mulf %116, %120 : vector<8x32xf32>
    %cst_42 = arith.constant dense<0.000000e+00> : vector<8x128xf32>
    %122 = tpu.matmul %121, %1, %cst_42 {dimension_numbers = #tpu.dot_dimension_numbers<[1], [0], [0], [1], [0, 0, 1, 1], [], []>} : vector<8x32xf32>, vector<32x128xf32>, vector<8x128xf32> -> vector<8x128xf32>
    %123 = arith.addf %122, %23 : vector<8x128xf32>
    %124 = vector.extract_strided_slice %123 {offsets = [0, 0], sizes = [8, 96], strides = [1, 1]} : vector<8x128xf32> to vector<8x96xf32>
    %125 = arith.negf %124 : vector<8x96xf32>
    %126 = math.exp %125 : vector<8x96xf32>
    %cst_43 = arith.constant 1.000000e+00 : f32
    %127 = vector.broadcast %cst_43 : f32 to vector<8x96xf32>
    %128 = arith.addf %127, %126 : vector<8x96xf32>
    %129 = arith.divf %127, %128 : vector<8x96xf32>
    %130 = vector.extract_strided_slice %123 {offsets = [0, 96], sizes = [8, 32], strides = [1, 1]} : vector<8x128xf32> to vector<8x32xf32>
    %131 = math.tanh %130 : vector<8x32xf32>
    %132 = vector.extract_strided_slice %129 {offsets = [0, 0], sizes = [8, 32], strides = [1, 1]} : vector<8x96xf32> to vector<8x32xf32>
    %133 = vector.extract_strided_slice %129 {offsets = [0, 32], sizes = [8, 32], strides = [1, 1]} : vector<8x96xf32> to vector<8x32xf32>
    %134 = vector.extract_strided_slice %129 {offsets = [0, 64], sizes = [8, 32], strides = [1, 1]} : vector<8x96xf32> to vector<8x32xf32>
    %135 = arith.mulf %133, %119 : vector<8x32xf32>
    %136 = arith.mulf %132, %131 : vector<8x32xf32>
    %137 = arith.addf %135, %136 : vector<8x32xf32>
    %138 = math.tanh %137 : vector<8x32xf32>
    %139 = arith.mulf %134, %138 : vector<8x32xf32>
    %cst_44 = arith.constant dense<0.000000e+00> : vector<8x128xf32>
    %140 = tpu.matmul %139, %1, %cst_44 {dimension_numbers = #tpu.dot_dimension_numbers<[1], [0], [0], [1], [0, 0, 1, 1], [], []>} : vector<8x32xf32>, vector<32x128xf32>, vector<8x128xf32> -> vector<8x128xf32>
    %141 = arith.addf %140, %26 : vector<8x128xf32>
    %142 = vector.extract_strided_slice %141 {offsets = [0, 0], sizes = [8, 96], strides = [1, 1]} : vector<8x128xf32> to vector<8x96xf32>
    %143 = arith.negf %142 : vector<8x96xf32>
    %144 = math.exp %143 : vector<8x96xf32>
    %cst_45 = arith.constant 1.000000e+00 : f32
    %145 = vector.broadcast %cst_45 : f32 to vector<8x96xf32>
    %146 = arith.addf %145, %144 : vector<8x96xf32>
    %147 = arith.divf %145, %146 : vector<8x96xf32>
    %148 = vector.extract_strided_slice %141 {offsets = [0, 96], sizes = [8, 32], strides = [1, 1]} : vector<8x128xf32> to vector<8x32xf32>
    %149 = math.tanh %148 : vector<8x32xf32>
    %150 = vector.extract_strided_slice %147 {offsets = [0, 0], sizes = [8, 32], strides = [1, 1]} : vector<8x96xf32> to vector<8x32xf32>
    %151 = vector.extract_strided_slice %147 {offsets = [0, 32], sizes = [8, 32], strides = [1, 1]} : vector<8x96xf32> to vector<8x32xf32>
    %152 = vector.extract_strided_slice %147 {offsets = [0, 64], sizes = [8, 32], strides = [1, 1]} : vector<8x96xf32> to vector<8x32xf32>
    %153 = arith.mulf %151, %137 : vector<8x32xf32>
    %154 = arith.mulf %150, %149 : vector<8x32xf32>
    %155 = arith.addf %153, %154 : vector<8x32xf32>
    %156 = math.tanh %155 : vector<8x32xf32>
    %157 = arith.mulf %152, %156 : vector<8x32xf32>
    %cst_46 = arith.constant dense<0.000000e+00> : vector<8x128xf32>
    %158 = tpu.matmul %157, %1, %cst_46 {dimension_numbers = #tpu.dot_dimension_numbers<[1], [0], [0], [1], [0, 0, 1, 1], [], []>} : vector<8x32xf32>, vector<32x128xf32>, vector<8x128xf32> -> vector<8x128xf32>
    %159 = arith.addf %158, %29 : vector<8x128xf32>
    %160 = vector.extract_strided_slice %159 {offsets = [0, 0], sizes = [8, 96], strides = [1, 1]} : vector<8x128xf32> to vector<8x96xf32>
    %161 = arith.negf %160 : vector<8x96xf32>
    %162 = math.exp %161 : vector<8x96xf32>
    %cst_47 = arith.constant 1.000000e+00 : f32
    %163 = vector.broadcast %cst_47 : f32 to vector<8x96xf32>
    %164 = arith.addf %163, %162 : vector<8x96xf32>
    %165 = arith.divf %163, %164 : vector<8x96xf32>
    %166 = vector.extract_strided_slice %159 {offsets = [0, 96], sizes = [8, 32], strides = [1, 1]} : vector<8x128xf32> to vector<8x32xf32>
    %167 = math.tanh %166 : vector<8x32xf32>
    %168 = vector.extract_strided_slice %165 {offsets = [0, 0], sizes = [8, 32], strides = [1, 1]} : vector<8x96xf32> to vector<8x32xf32>
    %169 = vector.extract_strided_slice %165 {offsets = [0, 32], sizes = [8, 32], strides = [1, 1]} : vector<8x96xf32> to vector<8x32xf32>
    %170 = vector.extract_strided_slice %165 {offsets = [0, 64], sizes = [8, 32], strides = [1, 1]} : vector<8x96xf32> to vector<8x32xf32>
    %171 = arith.mulf %169, %155 : vector<8x32xf32>
    %172 = arith.mulf %168, %167 : vector<8x32xf32>
    %173 = arith.addf %171, %172 : vector<8x32xf32>
    %174 = math.tanh %173 : vector<8x32xf32>
    %175 = arith.mulf %170, %174 : vector<8x32xf32>
    %cst_48 = arith.constant dense<0.000000e+00> : vector<8x128xf32>
    %176 = tpu.matmul %175, %2, %cst_48 {dimension_numbers = #tpu.dot_dimension_numbers<[1], [0], [0], [1], [0, 0, 1, 1], [], []>} : vector<8x32xf32>, vector<32x128xf32>, vector<8x128xf32> -> vector<8x128xf32>
    %177 = vector.broadcast %3 : vector<1x128xf32> to vector<8x128xf32>
    %178 = arith.addf %176, %177 : vector<8x128xf32>
    %cst_49 = arith.constant 0.000000e+00 : f32
    %179 = vector.broadcast %cst_49 : f32 to vector<8x128xf32>
    %180 = arith.maximumf %178, %179 : vector<8x128xf32>
    %cst_50 = arith.constant dense<0.000000e+00> : vector<8x128xf32>
    %181 = tpu.matmul %180, %4, %cst_50 {dimension_numbers = #tpu.dot_dimension_numbers<[1], [0], [0], [1], [0, 0, 1, 1], [], []>} : vector<8x128xf32>, vector<128x128xf32>, vector<8x128xf32> -> vector<8x128xf32>
    %182 = vector.broadcast %5 : vector<1x128xf32> to vector<8x128xf32>
    %183 = arith.addf %181, %182 : vector<8x128xf32>
    %c0_51 = arith.constant 0 : index
    %c0_52 = arith.constant 0 : index
    %184 = vector.load %arg2[%c0_51, %c0_52] : memref<8x128xf32, #tpu.memory_space<vmem>>, vector<8x128xf32>
    tpu.vector_store %arg2[%c0_51, %c0_52], %183 {strides = array<i32>} : memref<8x128xf32, #tpu.memory_space<vmem>>, vector<8x128xf32>,
    return
  }
}

</mosaic_0001>

<llo_original>
// kernel: lstm_forward.1
$region0: #{lstm_forward.1}
  #allocation0 [shape = 'u32[]', space=smem, size = 0x4, offset = 0x4, fixed_abs, tag = 'smem constant byte address 0x4 - core index']
  #allocation1 [shape = 'u32[72,128]{1,0:T(1,128)}', space=vmem, size = 0x9000, scoped, tag = 'internal scratch']
  %s0 = inlined_call_operand.vmem [shape: f32[8,8,16], index: 0, kind: input, shape index: {}]
  %s1 = inlined_call_operand.vmem [shape: f32[224,128], index: 1, kind: input, shape index: {}]
  %s2 = inlined_call_operand.vmem [shape: f32[8,128], index: 2, kind: output, shape index: {}]
  %s3 = sld [smem:[#allocation0]]
  $region18: #{lstm_forward.1} parent=0
    _
  %s5 = ssub.s32 1, %s3
  %s6 = scalar_select 0, %s5, %s3
  // Predicated region
  $region2: #{lstm_forward.1} parent=0 // pred_check
    _
  $region3: #{lstm_forward.1} parent=0 // pred_check_branch
    %8 = sbr.rel (0) target = $region5
  $region4: #{lstm_forward.1} parent=0 // pred_region
    _
  $region5: #{lstm_forward.1} parent=0 // pred_fallthru
    _
  // Predicated region
  $region6: #{lstm_forward.1} parent=0 // pred_check
    _
  $region7: #{lstm_forward.1} parent=0 // pred_check_branch
    %10 = sbr.rel (0) target = $region9
  $region8: #{lstm_forward.1} parent=0 // pred_region
    _
  $region9: #{lstm_forward.1} parent=0 // pred_fallthru
    _
  %v11 = vld [vmem:[%s1] sm:$0xff]
  %v12 = vld [vmem:[%s1 + $0x8] sm:$0xff]
  %v13 = vld [vmem:[%s1 + $0x10] sm:$0xff]
  %v14 = vld [vmem:[%s1 + $0x18] sm:$0xff]
  %v15 = vld [vmem:[%s1 + $0x20] sm:$0xff]
  %v16 = vld [vmem:[%s1 + $0x28] sm:$0xff]
  %v17 = vld [vmem:[%s1 + $0x30] sm:$0xff]
  %v18 = vld [vmem:[%s1 + $0x38] sm:$0xff]
  %v19 = vld [vmem:[%s1 + $0x40] sm:$0xff]
  %v20 = vld [vmem:[%s1 + $0x48] sm:$0xff]
  %v21 = vld [vmem:[%s1 + $0x50] sm:$0x1]
  %v22 = vld [vmem:[%s1 + $0x58] sm:$0xff]
  %v23 = vld [vmem:[%s1 + $0x60] sm:$0xff]
  %v24 = vld [vmem:[%s1 + $0x68] sm:$0xff]
  %v25 = vld [vmem:[%s1 + $0x70] sm:$0xff]
  %v26 = vld [vmem:[%s1 + $0x78] sm:$0xff]
  %v27 = vld [vmem:[%s1 + $0x80] sm:$0xff]
  %v28 = vld [vmem:[%s1 + $0x88] sm:$0xff]
  %v29 = vld [vmem:[%s1 + $0x90] sm:$0xff]
  %v30 = vld [vmem:[%s1 + $0x98] sm:$0xff]
  %v31 = vld [vmem:[%s1 + $0xa0] sm:$0xff]
  %v32 = vld [vmem:[%s1 + $0xa8] sm:$0xff]
  %v33 = vld [vmem:[%s1 + $0xb0] sm:$0xff]
  %v34 = vld [vmem:[%s1 + $0xb8] sm:$0xff]
  %v35 = vld [vmem:[%s1 + $0xc0] sm:$0xff]
  %v36 = vld [vmem:[%s1 + $0xc8] sm:$0xff]
  %v37 = vld [vmem:[%s1 + $0xd0] sm:$0xff]
  %v38 = vld [vmem:[%s1 + $0xd8] sm:$0x1]
  %v39 = vld [vmem:[%s0] sm:$0xff]
  %vm40 = vcmask 130048
  %v42 = vsel %vm40, %v39, 0
  %44 = vmatpush.msra.mxu0 0.0
  %45 = vmatpush.msra.mxu0 0.0
  %46 = vmatpush.msra.mxu0 0.0
  %47 = vmatpush.msra.mxu0 0.0
  %48 = vmatpush.msra.mxu0 0.0
  %49 = vmatpush.msra.mxu0 0.0
  %50 = vmatpush.msra.mxu0 0.0
  %51 = vmatpush.msra.mxu0 0.0
  %52 = vmatpush.msra.mxu0 0.0
  %53 = vmatpush.msra.mxu0 0.0
  %54 = vmatpush.msra.mxu0 0.0
  %55 = vmatpush.msra.mxu0 0.0
  %56 = vmatpush.msra.mxu0 0.0
  %57 = vmatpush.msra.mxu0 0.0
  %58 = vmatpush.msra.mxu0 %v12
  %59 = vmatpush.msra.mxu0 %v11
  %60 = vmatmul.f32.gmra.mxu0 %v42
  %v61 = vpop.f32.mrf.mxu0
  %v62 = vadd.f32 0.0, %v61
  %63 = vdwg.mxu0
  %s64 = scalar_lea.vmem %s0, 8
  %v65 = vld [vmem:[%s64] sm:$0xff]
  %v67 = vsel %vm40, %v65, 0
  %69 = vmatpush.msra.mxu0 0.0
  %70 = vmatpush.msra.mxu0 0.0
  %71 = vmatpush.msra.mxu0 0.0
  %72 = vmatpush.msra.mxu0 0.0
  %73 = vmatpush.msra.mxu0 0.0
  %74 = vmatpush.msra.mxu0 0.0
  %75 = vmatpush.msra.mxu0 0.0
  %76 = vmatpush.msra.mxu0 0.0
  %77 = vmatpush.msra.mxu0 0.0
  %78 = vmatpush.msra.mxu0 0.0
  %79 = vmatpush.msra.mxu0 0.0
  %80 = vmatpush.msra.mxu0 0.0
  %81 = vmatpush.msra.mxu0 0.0
  %82 = vmatpush.msra.mxu0 0.0
  %83 = vmatpush.msra.mxu0 %v12
  %84 = vmatpush.msra.mxu0 %v11
  %85 = vmatmul.f32.gmra.mxu0 %v67
  %v86 = vpop.f32.mrf.mxu0
  %v87 = vadd.f32 0.0, %v86
  %88 = vdwg.mxu0
  %s89 = scalar_lea.vmem %s0, 16
  %v90 = vld [vmem:[%s89] sm:$0xff]
  %v92 = vsel %vm40, %v90, 0
  %94 = vmatpush.msra.mxu0 0.0
  %95 = vmatpush.msra.mxu0 0.0
  %96 = vmatpush.msra.mxu0 0.0
  %97 = vmatpush.msra.mxu0 0.0
  %98 = vmatpush.msra.mxu0 0.0
  %99 = vmatpush.msra.mxu0 0.0
  %100 = vmatpush.msra.mxu0 0.0
  %101 = vmatpush.msra.mxu0 0.0
  %102 = vmatpush.msra.mxu0 0.0
  %103 = vmatpush.msra.mxu0 0.0
  %104 = vmatpush.msra.mxu0 0.0
  %105 = vmatpush.msra.mxu0 0.0
  %106 = vmatpush.msra.mxu0 0.0
  %107 = vmatpush.msra.mxu0 0.0
  %108 = vmatpush.msra.mxu0 %v12
  %109 = vmatpush.msra.mxu0 %v11
  %110 = vmatmul.f32.gmra.mxu0 %v92
  %v111 = vpop.f32.mrf.mxu0
  %v112 = vadd.f32 0.0, %v111
  %113 = vdwg.mxu0
  %s114 = scalar_lea.vmem %s0, 24
  %v115 = vld [vmem:[%s114] sm:$0xff]
  %v117 = vsel %vm40, %v115, 0
  %119 = vmatpush.msra.mxu0 0.0
  %120 = vmatpush.msra.mxu0 0.0
  %121 = vmatpush.msra.mxu0 0.0
  %122 = vmatpush.msra.mxu0 0.0
  %123 = vmatpush.msra.mxu0 0.0
  %124 = vmatpush.msra.mxu0 0.0
  %125 = vmatpush.msra.mxu0 0.0
  %126 = vmatpush.msra.mxu0 0.0
  %127 = vmatpush.msra.mxu0 0.0
  %128 = vmatpush.msra.mxu0 0.0
  %129 = vmatpush.msra.mxu0 0.0
  %130 = vmatpush.msra.mxu0 0.0
  %131 = vmatpush.msra.mxu0 0.0
  %132 = vmatpush.msra.mxu0 0.0
  %133 = vmatpush.msra.mxu0 %v12
  %134 = vmatpush.msra.mxu0 %v11
  %135 = vmatmul.f32.gmra.mxu0 %v117
  %v136 = vpop.f32.mrf.mxu0
  %v137 = vadd.f32 0.0, %v136
  %138 = vdwg.mxu0
  %s139 = scalar_lea.vmem %s0, 32
  %v140 = vld [vmem:[%s139] sm:$0xff]
  %v142 = vsel %vm40, %v140, 0
  %144 = vmatpush.msra.mxu0 0.0
  %145 = vmatpush.msra.mxu0 0.0
  %146 = vmatpush.msra.mxu0 0.0
  %147 = vmatpush.msra.mxu0 0.0
  %148 = vmatpush.msra.mxu0 0.0
  %149 = vmatpush.msra.mxu0 0.0
  %150 = vmatpush.msra.mxu0 0.0
  %151 = vmatpush.msra.mxu0 0.0
  %152 = vmatpush.msra.mxu0 0.0
  %153 = vmatpush.msra.mxu0 0.0
  %154 = vmatpush.msra.mxu0 0.0
  %155 = vmatpush.msra.mxu0 0.0
  %156 = vmatpush.msra.mxu0 0.0
  %157 = vmatpush.msra.mxu0 0.0
  %158 = vmatpush.msra.mxu0 %v12
  %159 = vmatpush.msra.mxu0 %v11
  %160 = vmatmul.f32.gmra.mxu0 %v142
  %v161 = vpop.f32.mrf.mxu0
  %v162 = vadd.f32 0.0, %v161
  %163 = vdwg.mxu0
  %s164 = scalar_lea.vmem %s0, 40
  %v165 = vld [vmem:[%s164] sm:$0xff]
  %v167 = vsel %vm40, %v165, 0
  %169 = vmatpush.msra.mxu0 0.0
  %170 = vmatpush.msra.mxu0 0.0
  %171 = vmatpush.msra.mxu0 0.0
  %172 = vmatpush.msra.mxu0 0.0
  %173 = vmatpush.msra.mxu0 0.0
  %174 = vmatpush.msra.mxu0 0.0
  %175 = vmatpush.msra.mxu0 0.0
  %176 = vmatpush.msra.mxu0 0.0
  %177 = vmatpush.msra.mxu0 0.0
  %178 = vmatpush.msra.mxu0 0.0
  %179 = vmatpush.msra.mxu0 0.0
  %180 = vmatpush.msra.mxu0 0.0
  %181 = vmatpush.msra.mxu0 0.0
  %182 = vmatpush.msra.mxu0 0.0
  %183 = vmatpush.msra.mxu0 %v12
  %184 = vmatpush.msra.mxu0 %v11
  %185 = vmatmul.f32.gmra.mxu0 %v167
  %v186 = vpop.f32.mrf.mxu0
  %v187 = vadd.f32 0.0, %v186
  %188 = vdwg.mxu0
  %s189 = scalar_lea.vmem %s0, 48
  %v190 = vld [vmem:[%s189] sm:$0xff]
  %v192 = vsel %vm40, %v190, 0
  %194 = vmatpush.msra.mxu0 0.0
  %195 = vmatpush.msra.mxu0 0.0
  %196 = vmatpush.msra.mxu0 0.0
  %197 = vmatpush.msra.mxu0 0.0
  %198 = vmatpush.msra.mxu0 0.0
  %199 = vmatpush.msra.mxu0 0.0
  %200 = vmatpush.msra.mxu0 0.0
  %201 = vmatpush.msra.mxu0 0.0
  %202 = vmatpush.msra.mxu0 0.0
  %203 = vmatpush.msra.mxu0 0.0
  %204 = vmatpush.msra.mxu0 0.0
  %205 = vmatpush.msra.mxu0 0.0
  %206 = vmatpush.msra.mxu0 0.0
  %207 = vmatpush.msra.mxu0 0.0
  %208 = vmatpush.msra.mxu0 %v12
  %209 = vmatpush.msra.mxu0 %v11
  %210 = vmatmul.f32.gmra.mxu0 %v192
  %v211 = vpop.f32.mrf.mxu0
  %v212 = vadd.f32 0.0, %v211
  %213 = vdwg.mxu0
  %s214 = scalar_lea.vmem %s0, 56
  %v215 = vld [vmem:[%s214] sm:$0xff]
  %v217 = vsel %vm40, %v215, 0
  %219 = vmatpush.msra.mxu0 0.0
  %220 = vmatpush.msra.mxu0 0.0
  %221 = vmatpush.msra.mxu0 0.0
  %222 = vmatpush.msra.mxu0 0.0
  %223 = vmatpush.msra.mxu0 0.0
  %224 = vmatpush.msra.mxu0 0.0
  %225 = vmatpush.msra.mxu0 0.0
  %226 = vmatpush.msra.mxu0 0.0
  %227 = vmatpush.msra.mxu0 0.0
  %228 = vmatpush.msra.mxu0 0.0
  %229 = vmatpush.msra.mxu0 0.0
  %230 = vmatpush.msra.mxu0 0.0
  %231 = vmatpush.msra.mxu0 0.0
  %232 = vmatpush.msra.mxu0 0.0
  %233 = vmatpush.msra.mxu0 %v12
  %234 = vmatpush.msra.mxu0 %v11
  %235 = vmatmul.f32.gmra.mxu0 %v217
  %v236 = vpop.f32.mrf.mxu0
  %v237 = vadd.f32 0.0, %v236
  %238 = vdwg.mxu0
  %vm239 = vcmask 261120
  %v241 = vsel %vm239, 0.0, 0
  %243 = vmatpush.msra.mxu0 0.0
  %244 = vmatpush.msra.mxu0 0.0
  %245 = vmatpush.msra.mxu0 0.0
  %246 = vmatpush.msra.mxu0 0.0
  %247 = vmatpush.msra.mxu0 0.0
  %248 = vmatpush.msra.mxu0 0.0
  %249 = vmatpush.msra.mxu0 0.0
  %250 = vmatpush.msra.mxu0 0.0
  %251 = vmatpush.msra.mxu0 0.0
  %252 = vmatpush.msra.mxu0 0.0
  %253 = vmatpush.msra.mxu0 0.0
  %254 = vmatpush.msra.mxu0 0.0
  %255 = vmatpush.msra.mxu0 %v16
  %256 = vmatpush.msra.mxu0 %v15
  %257 = vmatpush.msra.mxu0 %v14
  %258 = vmatpush.msra.mxu0 %v13
  %259 = vmatmul.f32.gmra.mxu0 %v241
  %v260 = vpop.f32.mrf.mxu0
  %v261 = vadd.f32 %v62, %v260
  %262 = vdwg.mxu0
  %v263 = vxor.u32 %v261, 2147483648
  %v264 = vmul.f32 %v263, 1.442695
  %v265 = vpow.pop %v264
  %v266 = vadd.f32 %v265, 1.0
  %v267 = vrcp.pop %v266
  %v268 = vmul.f32 %v266, %v267
  %v269 = vsub.f32 1.0, %v268
  %v270 = vmul.f32 %v267, %v269
  %v271 = vadd.f32 %v267, %v270
  %vm272 = vweird.f32 %v266
  %vm273 = vweird.f32 %v267
  %vm274 = vmor %vm272, %vm273
  %v275 = vsel %vm274, %v267, %v271
  %v276 = vand.u32 2147483647, %v266
  %vm277 = vcmp.eq.f32.partialorder %v276, 8.507059e+37
  %v278 = vand.u32 %v266, 2147483648
  %v279 = vor.u32 1.1754944e-38, %v278
  %v280 = vsel %vm277, %v279, %v275
  %v281 = vmul.f32 1.0, %v280
  %v282 = vtanh.pop %v261
  %v283 = vmul.f32 %v281, 0.0
  %285 = vrot.lane.b32.xlu0 %v282, 32
  %v286 = vpop.permute.xlu0 %285
  %v288 = vmul.f32 %v281, %v286
  %290 = vrot.lane.b32.xlu0 %v288, 32
  %v291 = vpop.permute.xlu0 %290
  %v293 = vadd.f32 %v283, %v291
  %v294 = vtanh.pop %v293
  %296 = vrot.lane.b32.xlu0 %v294, 32
  %v297 = vpop.permute.xlu0 %296
  %v299 = vmul.f32 %v281, %v297
  %301 = vrot.lane.b32.xlu0 %v299, 64
  %v302 = vpop.permute.xlu0 %301
  %v303 = vsel %vm239, %v302, 0
  %305 = vmatpush.msra.mxu0 0.0
  %306 = vmatpush.msra.mxu0 0.0
  %307 = vmatpush.msra.mxu0 0.0
  %308 = vmatpush.msra.mxu0 0.0
  %309 = vmatpush.msra.mxu0 0.0
  %310 = vmatpush.msra.mxu0 0.0
  %311 = vmatpush.msra.mxu0 0.0
  %312 = vmatpush.msra.mxu0 0.0
  %313 = vmatpush.msra.mxu0 0.0
  %314 = vmatpush.msra.mxu0 0.0
  %315 = vmatpush.msra.mxu0 0.0
  %316 = vmatpush.msra.mxu0 0.0
  %317 = vmatpush.msra.mxu0 %v16
  %318 = vmatpush.msra.mxu0 %v15
  %319 = vmatpush.msra.mxu0 %v14
  %320 = vmatpush.msra.mxu0 %v13
  %321 = vmatmul.f32.gmra.mxu0 %v303
  %v322 = vpop.f32.mrf.mxu0
  %v323 = vadd.f32 %v87, %v322
  %324 = vdwg.mxu0
  %v325 = vxor.u32 %v323, 2147483648
  %v326 = vmul.f32 %v325, 1.442695
  %v327 = vpow.pop %v326
  %v328 = vadd.f32 %v327, 1.0
  %v329 = vrcp.pop %v328
  %v330 = vmul.f32 %v328, %v329
  %v331 = vsub.f32 1.0, %v330
  %v332 = vmul.f32 %v329, %v331
  %v333 = vadd.f32 %v329, %v332
  %vm334 = vweird.f32 %v328
  %vm335 = vweird.f32 %v329
  %vm336 = vmor %vm334, %vm335
  %v337 = vsel %vm336, %v329, %v333
  %v338 = vand.u32 2147483647, %v328
  %vm339 = vcmp.eq.f32.partialorder %v338, 8.507059e+37
  %v340 = vand.u32 %v328, 2147483648
  %v341 = vor.u32 1.1754944e-38, %v340
  %v342 = vsel %vm339, %v341, %v337
  %v343 = vmul.f32 1.0, %v342
  %v344 = vtanh.pop %v323
  %v345 = vmul.f32 %v343, %v293
  %347 = vrot.lane.b32.xlu0 %v344, 32
  %v348 = vpop.permute.xlu0 %347
  %v350 = vmul.f32 %v343, %v348
  %352 = vrot.lane.b32.xlu0 %v350, 32
  %v353 = vpop.permute.xlu0 %352
  %v355 = vadd.f32 %v345, %v353
  %v356 = vtanh.pop %v355
  %358 = vrot.lane.b32.xlu0 %v356, 32
  %v359 = vpop.permute.xlu0 %358
  %v361 = vmul.f32 %v343, %v359
  %363 = vrot.lane.b32.xlu0 %v361, 64
  %v364 = vpop.permute.xlu0 %363
  %v365 = vsel %vm239, %v364, 0
  %367 = vmatpush.msra.mxu0 0.0
  %368 = vmatpush.msra.mxu0 0.0
  %369 = vmatpush.msra.mxu0 0.0
  %370 = vmatpush.msra.mxu0 0.0
  %371 = vmatpush.msra.mxu0 0.0
  %372 = vmatpush.msra.mxu0 0.0
  %373 = vmatpush.msra.mxu0 0.0
  %374 = vmatpush.msra.mxu0 0.0
  %375 = vmatpush.msra.mxu0 0.0
  %376 = vmatpush.msra.mxu0 0.0
  %377 = vmatpush.msra.mxu0 0.0
  %378 = vmatpush.msra.mxu0 0.0
  %379 = vmatpush.msra.mxu0 %v16
  %380 = vmatpush.msra.mxu0 %v15
  %381 = vmatpush.msra.mxu0 %v14
  %382 = vmatpush.msra.mxu0 %v13
  %383 = vmatmul.f32.gmra.mxu0 %v365
  %v384 = vpop.f32.mrf.mxu0
  %v385 = vadd.f32 %v112, %v384
  %386 = vdwg.mxu0
  %v387 = vxor.u32 %v385, 2147483648
  %v388 = vmul.f32 %v387, 1.442695
  %v389 = vpow.pop %v388
  %v390 = vadd.f32 %v389, 1.0
  %v391 = vrcp.pop %v390
  %v392 = vmul.f32 %v390, %v391
  %v393 = vsub.f32 1.0, %v392
  %v394 = vmul.f32 %v391, %v393
  %v395 = vadd.f32 %v391, %v394
  %vm396 = vweird.f32 %v390
  %vm397 = vweird.f32 %v391
  %vm398 = vmor %vm396, %vm397
  %v399 = vsel %vm398, %v391, %v395
  %v400 = vand.u32 2147483647, %v390
  %vm401 = vcmp.eq.f32.partialorder %v400, 8.507059e+37
  %v402 = vand.u32 %v390, 2147483648
  %v403 = vor.u32 1.1754944e-38, %v402
  %v404 = vsel %vm401, %v403, %v399
  %v405 = vmul.f32 1.0, %v404
  %v406 = vtanh.pop %v385
  %v407 = vmul.f32 %v405, %v355
  %409 = vrot.lane.b32.xlu0 %v406, 32
  %v410 = vpop.permute.xlu0 %409
  %v412 = vmul.f32 %v405, %v410
  %414 = vrot.lane.b32.xlu0 %v412, 32
  %v415 = vpop.permute.xlu0 %414
  %v417 = vadd.f32 %v407, %v415
  %v418 = vtanh.pop %v417
  %420 = vrot.lane.b32.xlu0 %v418, 32
  %v421 = vpop.permute.xlu0 %420
  %v423 = vmul.f32 %v405, %v421
  %425 = vrot.lane.b32.xlu0 %v423, 64
  %v426 = vpop.permute.xlu0 %425
  %v427 = vsel %vm239, %v426, 0
  %429 = vmatpush.msra.mxu0 0.0
  %430 = vmatpush.msra.mxu0 0.0
  %431 = vmatpush.msra.mxu0 0.0
  %432 = vmatpush.msra.mxu0 0.0
  %433 = vmatpush.msra.mxu0 0.0
  %434 = vmatpush.msra.mxu0 0.0
  %435 = vmatpush.msra.mxu0 0.0
  %436 = vmatpush.msra.mxu0 0.0
  %437 = vmatpush.msra.mxu0 0.0
  %438 = vmatpush.msra.mxu0 0.0
  %439 = vmatpush.msra.mxu0 0.0
  %440 = vmatpush.msra.mxu0 0.0
  %441 = vmatpush.msra.mxu0 %v16
  %442 = vmatpush.msra.mxu0 %v15
  %443 = vmatpush.msra.mxu0 %v14
  %444 = vmatpush.msra.mxu0 %v13
  %445 = vmatmul.f32.gmra.mxu0 %v427
  %v446 = vpop.f32.mrf.mxu0
  %v447 = vadd.f32 %v137, %v446
  %448 = vdwg.mxu0
  %v449 = vxor.u32 %v447, 2147483648
  %v450 = vmul.f32 %v449, 1.442695
  %v451 = vpow.pop %v450
  %v452 = vadd.f32 %v451, 1.0
  %v453 = vrcp.pop %v452
  %v454 = vmul.f32 %v452, %v453
  %v455 = vsub.f32 1.0, %v454
  %v456 = vmul.f32 %v453, %v455
  %v457 = vadd.f32 %v453, %v456
  %vm458 = vweird.f32 %v452
  %vm459 = vweird.f32 %v453
  %vm460 = vmor %vm458, %vm459
  %v461 = vsel %vm460, %v453, %v457
  %v462 = vand.u32 2147483647, %v452
  %vm463 = vcmp.eq.f32.partialorder %v462, 8.507059e+37
  %v464 = vand.u32 %v452, 2147483648
  %v465 = vor.u32 1.1754944e-38, %v464
  %v466 = vsel %vm463, %v465, %v461
  %v467 = vmul.f32 1.0, %v466
  %v468 = vtanh.pop %v447
  %v469 = vmul.f32 %v467, %v417
  %471 = vrot.lane.b32.xlu0 %v468, 32
  %v472 = vpop.permute.xlu0 %471
  %v474 = vmul.f32 %v467, %v472
  %476 = vrot.lane.b32.xlu0 %v474, 32
  %v477 = vpop.permute.xlu0 %476
  %v479 = vadd.f32 %v469, %v477
  %v480 = vtanh.pop %v479
  %482 = vrot.lane.b32.xlu0 %v480, 32
  %v483 = vpop.permute.xlu0 %482
  %v485 = vmul.f32 %v467, %v483
  %487 = vrot.lane.b32.xlu0 %v485, 64
  %v488 = vpop.permute.xlu0 %487
  %v489 = vsel %vm239, %v488, 0
  %491 = vmatpush.msra.mxu0 0.0
  %492 = vmatpush.msra.mxu0 0.0
  %493 = vmatpush.msra.mxu0 0.0
  %494 = vmatpush.msra.mxu0 0.0
  %495 = vmatpush.msra.mxu0 0.0
  %496 = vmatpush.msra.mxu0 0.0
  %497 = vmatpush.msra.mxu0 0.0
  %498 = vmatpush.msra.mxu0 0.0
  %499 = vmatpush.msra.mxu0 0.0
  %500 = vmatpush.msra.mxu0 0.0
  %501 = vmatpush.msra.mxu0 0.0
  %502 = vmatpush.msra.mxu0 0.0
  %503 = vmatpush.msra.mxu0 %v16
  %504 = vmatpush.msra.mxu0 %v15
  %505 = vmatpush.msra.mxu0 %v14
  %506 = vmatpush.msra.mxu0 %v13
  %507 = vmatmul.f32.gmra.mxu0 %v489
  %v508 = vpop.f32.mrf.mxu0
  %v509 = vadd.f32 %v162, %v508
  %510 = vdwg.mxu0
  %v511 = vxor.u32 %v509, 2147483648
  %v512 = vmul.f32 %v511, 1.442695
  %v513 = vpow.pop %v512
  %v514 = vadd.f32 %v513, 1.0
  %v515 = vrcp.pop %v514
  %v516 = vmul.f32 %v514, %v515
  %v517 = vsub.f32 1.0, %v516
  %v518 = vmul.f32 %v515, %v517
  %v519 = vadd.f32 %v515, %v518
  %vm520 = vweird.f32 %v514
  %vm521 = vweird.f32 %v515
  %vm522 = vmor %vm520, %vm521
  %v523 = vsel %vm522, %v515, %v519
  %v524 = vand.u32 2147483647, %v514
  %vm525 = vcmp.eq.f32.partialorder %v524, 8.507059e+37
  %v526 = vand.u32 %v514, 2147483648
  %v527 = vor.u32 1.1754944e-38, %v526
  %v528 = vsel %vm525, %v527, %v523
  %v529 = vmul.f32 1.0, %v528
  %v530 = vtanh.pop %v509
  %v531 = vmul.f32 %v529, %v479
  %533 = vrot.lane.b32.xlu0 %v530, 32
  %v534 = vpop.permute.xlu0 %533
  %v536 = vmul.f32 %v529, %v534
  %538 = vrot.lane.b32.xlu0 %v536, 32
  %v539 = vpop.permute.xlu0 %538
  %v541 = vadd.f32 %v531, %v539
  %v542 = vtanh.pop %v541
  %544 = vrot.lane.b32.xlu0 %v542, 32
  %v545 = vpop.permute.xlu0 %544
  %v547 = vmul.f32 %v529, %v545
  %549 = vrot.lane.b32.xlu0 %v547, 64
  %v550 = vpop.permute.xlu0 %549
  %v551 = vsel %vm239, %v550, 0
  %553 = vmatpush.msra.mxu0 0.0
  %554 = vmatpush.msra.mxu0 0.0
  %555 = vmatpush.msra.mxu0 0.0
  %556 = vmatpush.msra.mxu0 0.0
  %557 = vmatpush.msra.mxu0 0.0
  %558 = vmatpush.msra.mxu0 0.0
  %559 = vmatpush.msra.mxu0 0.0
  %560 = vmatpush.msra.mxu0 0.0
  %561 = vmatpush.msra.mxu0 0.0
  %562 = vmatpush.msra.mxu0 0.0
  %563 = vmatpush.msra.mxu0 0.0
  %564 = vmatpush.msra.mxu0 0.0
  %565 = vmatpush.msra.mxu0 %v16
  %566 = vmatpush.msra.mxu0 %v15
  %567 = vmatpush.msra.mxu0 %v14
  %568 = vmatpush.msra.mxu0 %v13
  %569 = vmatmul.f32.gmra.mxu0 %v551
  %v570 = vpop.f32.mrf.mxu0
  %v571 = vadd.f32 %v187, %v570
  %572 = vdwg.mxu0
  %v573 = vxor.u32 %v571, 2147483648
  %v574 = vmul.f32 %v573, 1.442695
  %v575 = vpow.pop %v574
  %v576 = vadd.f32 %v575, 1.0
  %v577 = vrcp.pop %v576
  %v578 = vmul.f32 %v576, %v577
  %v579 = vsub.f32 1.0, %v578
  %v580 = vmul.f32 %v577, %v579
  %v581 = vadd.f32 %v577, %v580
  %vm582 = vweird.f32 %v576
  %vm583 = vweird.f32 %v577
  %vm584 = vmor %vm582, %vm583
  %v585 = vsel %vm584, %v577, %v581
  %v586 = vand.u32 2147483647, %v576
  %vm587 = vcmp.eq.f32.partialorder %v586, 8.507059e+37
  %v588 = vand.u32 %v576, 2147483648
  %v589 = vor.u32 1.1754944e-38, %v588
  %v590 = vsel %vm587, %v589, %v585
  %v591 = vmul.f32 1.0, %v590
  %v592 = vtanh.pop %v571
  %v593 = vmul.f32 %v591, %v541
  %595 = vrot.lane.b32.xlu0 %v592, 32
  %v596 = vpop.permute.xlu0 %595
  %v598 = vmul.f32 %v591, %v596
  %600 = vrot.lane.b32.xlu0 %v598, 32
  %v601 = vpop.permute.xlu0 %600
  %v603 = vadd.f32 %v593, %v601
  %v604 = vtanh.pop %v603
  %606 = vrot.lane.b32.xlu0 %v604, 32
  %v607 = vpop.permute.xlu0 %606
  %v609 = vmul.f32 %v591, %v607
  %611 = vrot.lane.b32.xlu0 %v609, 64
  %v612 = vpop.permute.xlu0 %611
  %v613 = vsel %vm239, %v612, 0
  %615 = vmatpush.msra.mxu0 0.0
  %616 = vmatpush.msra.mxu0 0.0
  %617 = vmatpush.msra.mxu0 0.0
  %618 = vmatpush.msra.mxu0 0.0
  %619 = vmatpush.msra.mxu0 0.0
  %620 = vmatpush.msra.mxu0 0.0
  %621 = vmatpush.msra.mxu0 0.0
  %622 = vmatpush.msra.mxu0 0.0
  %623 = vmatpush.msra.mxu0 0.0
  %624 = vmatpush.msra.mxu0 0.0
  %625 = vmatpush.msra.mxu0 0.0
  %626 = vmatpush.msra.mxu0 0.0
  %627 = vmatpush.msra.mxu0 %v16
  %628 = vmatpush.msra.mxu0 %v15
  %629 = vmatpush.msra.mxu0 %v14
  %630 = vmatpush.msra.mxu0 %v13
  %631 = vmatmul.f32.gmra.mxu0 %v613
  %v632 = vpop.f32.mrf.mxu0
  %v633 = vadd.f32 %v212, %v632
  %634 = vdwg.mxu0
  %v635 = vxor.u32 %v633, 2147483648
  %v636 = vmul.f32 %v635, 1.442695
  %v637 = vpow.pop %v636
  %v638 = vadd.f32 %v637, 1.0
  %v639 = vrcp.pop %v638
  %v640 = vmul.f32 %v638, %v639
  %v641 = vsub.f32 1.0, %v640
  %v642 = vmul.f32 %v639, %v641
  %v643 = vadd.f32 %v639, %v642
  %vm644 = vweird.f32 %v638
  %vm645 = vweird.f32 %v639
  %vm646 = vmor %vm644, %vm645
  %v647 = vsel %vm646, %v639, %v643
  %v648 = vand.u32 2147483647, %v638
  %vm649 = vcmp.eq.f32.partialorder %v648, 8.507059e+37
  %v650 = vand.u32 %v638, 2147483648
  %v651 = vor.u32 1.1754944e-38, %v650
  %v652 = vsel %vm649, %v651, %v647
  %v653 = vmul.f32 1.0, %v652
  %v654 = vtanh.pop %v633
  %v655 = vmul.f32 %v653, %v603
  %657 = vrot.lane.b32.xlu0 %v654, 32
  %v658 = vpop.permute.xlu0 %657
  %v660 = vmul.f32 %v653, %v658
  %662 = vrot.lane.b32.xlu0 %v660, 32
  %v663 = vpop.permute.xlu0 %662
  %v665 = vadd.f32 %v655, %v663
  %v666 = vtanh.pop %v665
  %668 = vrot.lane.b32.xlu0 %v666, 32
  %v669 = vpop.permute.xlu0 %668
  %v671 = vmul.f32 %v653, %v669
  %673 = vrot.lane.b32.xlu0 %v671, 64
  %v674 = vpop.permute.xlu0 %673
  %v675 = vsel %vm239, %v674, 0
  %677 = vmatpush.msra.mxu0 0.0
  %678 = vmatpush.msra.mxu0 0.0
  %679 = vmatpush.msra.mxu0 0.0
  %680 = vmatpush.msra.mxu0 0.0
  %681 = vmatpush.msra.mxu0 0.0
  %682 = vmatpush.msra.mxu0 0.0
  %683 = vmatpush.msra.mxu0 0.0
  %684 = vmatpush.msra.mxu0 0.0
  %685 = vmatpush.msra.mxu0 0.0
  %686 = vmatpush.msra.mxu0 0.0
  %687 = vmatpush.msra.mxu0 0.0
  %688 = vmatpush.msra.mxu0 0.0
  %689 = vmatpush.msra.mxu0 %v16
  %690 = vmatpush.msra.mxu0 %v15
  %691 = vmatpush.msra.mxu0 %v14
  %692 = vmatpush.msra.mxu0 %v13
  %693 = vmatmul.f32.gmra.mxu0 %v675
  %v694 = vpop.f32.mrf.mxu0
  %v695 = vadd.f32 %v237, %v694
  %696 = vdwg.mxu0
  %v697 = vxor.u32 %v695, 2147483648
  %v698 = vmul.f32 %v697, 1.442695
  %v699 = vpow.pop %v698
  %v700 = vadd.f32 %v699, 1.0
  %v701 = vrcp.pop %v700
  %v702 = vmul.f32 %v700, %v701
  %v703 = vsub.f32 1.0, %v702
  %v704 = vmul.f32 %v701, %v703
  %v705 = vadd.f32 %v701, %v704
  %vm706 = vweird.f32 %v700
  %vm707 = vweird.f32 %v701
  %vm708 = vmor %vm706, %vm707
  %v709 = vsel %vm708, %v701, %v705
  %v710 = vand.u32 2147483647, %v700
  %vm711 = vcmp.eq.f32.partialorder %v710, 8.507059e+37
  %v712 = vand.u32 %v700, 2147483648
  %v713 = vor.u32 1.1754944e-38, %v712
  %v714 = vsel %vm711, %v713, %v709
  %v715 = vmul.f32 1.0, %v714
  %v716 = vtanh.pop %v695
  %v717 = vmul.f32 %v715, %v665
  %719 = vrot.lane.b32.xlu0 %v716, 32
  %v720 = vpop.permute.xlu0 %719
  %v722 = vmul.f32 %v715, %v720
  %724 = vrot.lane.b32.xlu0 %v722, 32
  %v725 = vpop.permute.xlu0 %724
  %v727 = vadd.f32 %v717, %v725
  %v728 = vtanh.pop %v727
  %730 = vrot.lane.b32.xlu0 %v728, 32
  %v731 = vpop.permute.xlu0 %730
  %v733 = vmul.f32 %v715, %v731
  %v734 = vperm.slane %v21, 0
  %736 = vrot.lane.b32.xlu0 %v733, 64
  %v737 = vpop.permute.xlu0 %736
  %v738 = vsel %vm239, %v737, 0
  %740 = vmatpush.msra.mxu0 0.0
  %741 = vmatpush.msra.mxu0 0.0
  %742 = vmatpush.msra.mxu0 0.0
  %743 = vmatpush.msra.mxu0 0.0
  %744 = vmatpush.msra.mxu0 0.0
  %745 = vmatpush.msra.mxu0 0.0
  %746 = vmatpush.msra.mxu0 0.0
  %747 = vmatpush.msra.mxu0 0.0
  %748 = vmatpush.msra.mxu0 0.0
  %749 = vmatpush.msra.mxu0 0.0
  %750 = vmatpush.msra.mxu0 0.0
  %751 = vmatpush.msra.mxu0 0.0
  %752 = vmatpush.msra.mxu0 %v20
  %753 = vmatpush.msra.mxu0 %v19
  %754 = vmatpush.msra.mxu0 %v18
  %755 = vmatpush.msra.mxu0 %v17
  %756 = vmatmul.f32.gmra.mxu0 %v738
  %v757 = vpop.f32.mrf.mxu0
  %v758 = vadd.f32 %v734, %v757
  %759 = vdwg.mxu0
  %v760 = vmax.f32 %v758, 0.0
  %v761 = vperm.slane %v38, 0
  %762 = vmatpush.msra.mxu0 %v37
  %763 = vmatpush.msra.mxu0 %v36
  %764 = vmatpush.msra.mxu0 %v35
  %765 = vmatpush.msra.mxu0 %v34
  %766 = vmatpush.msra.mxu0 %v33
  %767 = vmatpush.msra.mxu0 %v32
  %768 = vmatpush.msra.mxu0 %v31
  %769 = vmatpush.msra.mxu0 %v30
  %770 = vmatpush.msra.mxu0 %v29
  %771 = vmatpush.msra.mxu0 %v28
  %772 = vmatpush.msra.mxu0 %v27
  %773 = vmatpush.msra.mxu0 %v26
  %774 = vmatpush.msra.mxu0 %v25
  %775 = vmatpush.msra.mxu0 %v24
  %776 = vmatpush.msra.mxu0 %v23
  %777 = vmatpush.msra.mxu0 %v22
  %778 = vmatmul.f32.gmra.mxu0 %v760
  %v779 = vpop.f32.mrf.mxu0
  %v780 = vadd.f32 %v761, %v779
  %781 = vdwg.mxu0
  %782 = vst [vmem:[%s2] sm:$0xff] %v780
  // Predicated region
  $region10: #{lstm_forward.1} parent=0 // pred_check
    _
  $region11: #{lstm_forward.1} parent=0 // pred_check_branch
    %784 = sbr.rel (0) target = $region13
  $region12: #{lstm_forward.1} parent=0 // pred_region
    _
  $region13: #{lstm_forward.1} parent=0 // pred_fallthru
    _
  // Predicated region
  $region14: #{lstm_forward.1} parent=0 // pred_check
    _
  $region15: #{lstm_forward.1} parent=0 // pred_check_branch
    %786 = sbr.rel (0) target = $region17
  $region16: #{lstm_forward.1} parent=0 // pred_region
    _
  $region17: #{lstm_forward.1} parent=0 // pred_fallthru
    _

</llo_original>
